<compile_context>
chip_gen: v6e
topology: v6e:2x2x1
jax: 0.10.0
libtpu: 0.0.40
codegen_flags: <defaults>
</compile_context>

<pallas_src>
import math
import functools

import jax
import jax.numpy as jnp
from jax import lax
from jax.experimental import pallas as pl
from jax.experimental.pallas import tpu as pltpu


def _round_up(x, m):
    return ((x + m - 1) // m) * m


def _vmem_capacity_bytes():
    """Physical VMEM per TensorCore (64 MiB on v7x, 128 MiB on v5e/v6e)."""
    try:
        return int(pltpu.get_tpu_info().vmem_capacity_bytes)
    except Exception:
        return 64 << 20            # conservative fallback (v7x value)


# ---------------------------------------------------------------------------
# Resident fast path: table lives in VMEM, rows selected via one-hot matmul.
# ---------------------------------------------------------------------------
def _embedding_onehot_kernel(ids_ref, tbl_ref, out_ref, *, scale, precision):
    ids = ids_ref[...]                                     # (rpb, 1) int32
    rpb = ids.shape[0]
    vocab = tbl_ref.shape[0]
    iota = lax.broadcasted_iota(jnp.int32, (rpb, vocab), 1)
    onehot = jnp.where(ids == iota, 1.0, 0.0).astype(tbl_ref.dtype)
    acc = jnp.dot(onehot, tbl_ref[...],
                  preferred_element_type=jnp.float32, precision=precision)
    out_ref[...] = (acc * scale).astype(out_ref.dtype)


# ---------------------------------------------------------------------------
# HBM gather path: table stays in HBM, per-row DMA straight into the output.
# ---------------------------------------------------------------------------
def _embedding_gather_kernel(ids_hbm, emb_hbm, out_ref, ids_smem, sem,
                             *, rows_per_block, scale):
    base = pl.program_id(0) * rows_per_block

    # (4) per-block id slice HBM -> SMEM (no whole-sequence SMEM residency).
    ids_cp = pltpu.make_async_copy(
        ids_hbm.at[pl.ds(base, rows_per_block)], ids_smem, sem.at[0])
    ids_cp.start()
    ids_cp.wait()

    # (2)(3) issue every row DMA straight into the output block; unrolled so
    # the descriptor stream packs tightly and all copies are in flight at once.
    def issue(j, carry):
        row = ids_smem[j]
        pltpu.make_async_copy(emb_hbm.at[row], out_ref.at[j], sem.at[1]).start()
        return carry

    lax.fori_loop(0, rows_per_block, issue, 0, unroll=8)

    # (1) ONE aggregate wait: every row copy moved d_pad*itemsize bytes and
    # there are rows_per_block of them, so this descriptor's byte count
    # matches the sum of the issued copies exactly (identical shapes/dtype).
    pltpu.make_async_copy(
        emb_hbm.at[pl.ds(0, rows_per_block)], out_ref, sem.at[1]).wait()

    # (8) one dense, lane-aligned, native-dtype scale, in place.
    out_ref[...] = out_ref[...] * scale


# ---------------------------------------------------------------------------
# Wrapper
# ---------------------------------------------------------------------------
def input_embeddings_pallas(token_ids, emb_table, *,
                            rows_per_block=256, force_gather=False):
    """Pallas equivalent of Inputembeddings.forward.

    token_ids : integer array of any leading shape
    emb_table : (vocab_size, d_model) float array
    returns   : (*token_ids.shape, d_model) array in emb_table.dtype
    """
    V, D = emb_table.shape
    lead_shape = token_ids.shape
    N = int(math.prod(lead_shape)) if lead_shape else 1

    itemsize = jnp.dtype(emb_table.dtype).itemsize
    sublane = max(8, 32 // itemsize)            # 8 rows f32, 16 bf16, 32 int8
    d_pad = _round_up(D, 128)                   # lane-dense output stores
    scale = math.sqrt(float(D))
    vmem_cap = _vmem_capacity_bytes()

    # ---- rows per grid step ------------------------------------------------
    per_row_bytes = d_pad * itemsize
    rpb = max(int(rows_per_block), sublane)
    rpb = min(rpb, _round_up(N, sublane))                     # never exceed N
    # (5) cap by per-generation VMEM budget: 2 pipelined output blocks resident.
    vmem_rpb_cap = max(
        sublane, ((vmem_cap // 3) // (2 * per_row_bytes)) // sublane * sublane)
    rpb = min(rpb, vmem_rpb_cap)
    # (9) keep >= 2 grid steps when possible so both v7x TensorCores get work.
    if N > sublane:
        rpb = min(rpb, _round_up((N + 1) // 2, sublane))
    rpb = _round_up(max(rpb, sublane), sublane)
    n_pad = _round_up(N, rpb)
    grid = n_pad // rpb

    # ---- operands ------------------------------------------------------------
    # Out-of-range ids are clamped (nn.Embedding would raise); padded ids
    # gather row 0 and are sliced away below.
    flat_ids = jnp.clip(token_ids.reshape(-1).astype(jnp.int32), 0, V - 1)
    if n_pad != N:
        flat_ids = jnp.pad(flat_ids, (0, n_pad - N))
    emb_p = emb_table if d_pad == D else jnp.pad(emb_table,
                                                 ((0, 0), (0, d_pad - D)))

    out_block_bytes = rpb * d_pad * itemsize
    table_bytes = V * d_pad * itemsize

    # (6) small-vocab fast path: table resident in VMEM, one-hot MXU select.
    fast_footprint = (2 * table_bytes + 2 * out_block_bytes
                      + rpb * V * (4 + itemsize) + (2 << 20))
    use_resident = ((not force_gather) and V <= 4096
                    and fast_footprint <= int(0.7 * vmem_cap))

    if use_resident:
        precision = jax.lax.Precision.HIGHEST if itemsize >= 4 else None
        kernel = functools.partial(_embedding_onehot_kernel,
                                   scale=scale, precision=precision)
        out_flat = pl.pallas_call(
            kernel,
            out_shape=jax.ShapeDtypeStruct((n_pad, d_pad), emb_table.dtype),
            grid=(grid,),
            in_specs=[
                pl.BlockSpec((rpb, 1), lambda i: (i, 0)),    # ids, sublane-major
                pl.BlockSpec((V, d_pad), lambda i: (0, 0)),  # whole table, resident
            ],
            out_specs=pl.BlockSpec((rpb, d_pad), lambda i: (i, 0)),
            compiler_params=pltpu.CompilerParams(
                dimension_semantics=("parallel",),
                vmem_limit_bytes=int(min(int(0.9 * vmem_cap),
                                         max(32 << 20, fast_footprint))),
            ),
        )(flat_ids.reshape(n_pad, 1), emb_p)
    else:
        # Aggregate-wait descriptor spans rpb table rows; make sure they exist.
        if V < rpb:
            emb_p = jnp.pad(emb_p, ((0, rpb - V), (0, 0)))
        kernel = functools.partial(_embedding_gather_kernel,
                                   rows_per_block=rpb, scale=scale)
        gather_vmem = 2 * out_block_bytes + (2 << 20)
        out_flat = pl.pallas_call(
            kernel,
            out_shape=jax.ShapeDtypeStruct((n_pad, d_pad), emb_table.dtype),
            grid=(grid,),
            in_specs=[
                pl.BlockSpec(memory_space=pl.ANY),     # ids stay in HBM
                pl.BlockSpec(memory_space=pl.ANY),     # table stays in HBM
            ],
            out_specs=pl.BlockSpec((rpb, d_pad), lambda i: (i, 0)),
            scratch_shapes=[
                pltpu.SMEM((rpb,), jnp.int32),         # per-block id staging
                pltpu.SemaphoreType.DMA((2,)),         # [0]=ids copy, [1]=rows
            ],
            compiler_params=pltpu.CompilerParams(
                dimension_semantics=("parallel",),
                vmem_limit_bytes=int(min(int(0.9 * vmem_cap),
                                         max(32 << 20, gather_vmem))),
            ),
        )(flat_ids, emb_p)

    return out_flat[:N, :D].reshape(*lead_shape, D)


if __name__ == "__main__":
    key = jax.random.PRNGKey(0)

    def ref_embed(ids, table):
        return table[ids].astype(jnp.float32) * math.sqrt(float(table.shape[1]))

    # Case 1: resident fast path, unaligned d_model, f32.
    d_model, vocab, B, S = 32, 64, 2, 8
    k1, k2, key = jax.random.split(key, 3)
    tbl = jax.random.normal(k1, (vocab, d_model), dtype=jnp.float32)
    ids = jax.random.randint(k2, (B, S), 0, vocab, dtype=jnp.int32)
    out = jax.block_until_ready(input_embeddings_pallas(ids, tbl))
    assert out.shape == (B, S, d_model)
    assert jnp.allclose(out.astype(jnp.float32), ref_embed(ids, tbl),
                        atol=1e-4, rtol=1e-4)

    # Case 2: resident fast path, bf16 table, ragged token count.
    d_model, vocab, B, S = 128, 100, 3, 5
    k1, k2, key = jax.random.split(key, 3)
    tbl = jax.random.normal(k1, (vocab, d_model),
                            dtype=jnp.float32).astype(jnp.bfloat16)
    ids = jax.random.randint(k2, (B, S), 0, vocab, dtype=jnp.int32)
    out = jax.block_until_ready(input_embeddings_pallas(ids, tbl))
    assert out.shape == (B, S, d_model)
    assert jnp.allclose(out.astype(jnp.float32), ref_embed(ids, tbl),
                        atol=3e-2, rtol=3e-2)

    # Case 3: HBM DMA-gather path (forced), f32, multi-step grid.
    d_model, vocab, B, S = 128, 512, 2, 24
    k1, k2, key = jax.random.split(key, 3)
    tbl = jax.random.normal(k1, (vocab, d_model), dtype=jnp.float32)
    ids = jax.random.randint(k2, (B, S), 0, vocab, dtype=jnp.int32)
    out = jax.block_until_ready(
        input_embeddings_pallas(ids, tbl, force_gather=True))
    assert out.shape == (B, S, d_model)
    assert jnp.allclose(out.astype(jnp.float32), ref_embed(ids, tbl),
                        atol=1e-5, rtol=1e-5)

    # Case 4: HBM DMA-gather path (forced), bf16, unaligned d_model.
    d_model, vocab, B, S = 64, 256, 2, 40
    k1, k2, key = jax.random.split(key, 3)
    tbl = jax.random.normal(k1, (vocab, d_model),
                            dtype=jnp.float32).astype(jnp.bfloat16)
    ids = jax.random.randint(k2, (B, S), 0, vocab, dtype=jnp.int32)
    out = jax.block_until_ready(
        input_embeddings_pallas(ids, tbl, force_gather=True))
    assert out.shape == (B, S, d_model)
    assert jnp.allclose(out.astype(jnp.float32), ref_embed(ids, tbl),
                        atol=3e-2, rtol=3e-2)

    print("KERNEL_OK")
</pallas_src>

<mosaic_0001>
module attributes {stable_mosaic.version = 11 : i64} {
  func.func @_embedding_onehot_kernel(%arg0: i32, %arg1: memref<8x1xi32, #tpu.memory_space<vmem>>, %arg2: memref<64x128xf32, #tpu.memory_space<vmem>>, %arg3: memref<8x128xf32, #tpu.memory_space<vmem>>) attributes {dimension_semantics = [#tpu.dimension_semantics<parallel>], iteration_bounds = array<i64: 2>, scalar_prefetch = 0 : i64, scratch_operands = 0 : i64, tpu.core_type = #tpu.core_type<tc>, window_params = [{transform_indices = @transform_0, window_bounds = array<i64: 8, 1>}, {pipeline_mode = #tpu.pipeline_mode<synchronous>, transform_indices = @transform_1, window_bounds = array<i64: 64, 128>}, {transform_indices = @transform_2, window_bounds = array<i64: 8, 128>}]} {
    %c0 = arith.constant 0 : index
    %c0_0 = arith.constant 0 : index
    %0 = vector.load %arg1[%c0, %c0_0] : memref<8x1xi32, #tpu.memory_space<vmem>>, vector<8x1xi32>
    %1 = tpu.iota {dimensions = array<i32: 1>} : vector<8x64xi32>
    %2 = vector.broadcast %0 : vector<8x1xi32> to vector<8x64xi32>
    %3 = arith.cmpi eq, %2, %1 : vector<8x64xi32>
    %cst = arith.constant 1.000000e+00 : f32
    %cst_1 = arith.constant 0.000000e+00 : f32
    %4 = vector.broadcast %cst : f32 to vector<8x64xf32>
    %5 = vector.broadcast %cst_1 : f32 to vector<8x64xf32>
    %6 = arith.select %3, %4, %5 : vector<8x64xi1>, vector<8x64xf32>
    %c0_2 = arith.constant 0 : index
    %c0_3 = arith.constant 0 : index
    %7 = vector.load %arg2[%c0_2, %c0_3] : memref<64x128xf32, #tpu.memory_space<vmem>>, vector<64x128xf32>
    %cst_4 = arith.constant dense<0.000000e+00> : vector<8x128xf32>
    %8 = tpu.matmul %6, %7, %cst_4 {dimension_numbers = #tpu.dot_dimension_numbers<[1], [0], [0], [1], [0, 0, 1, 1], [], []>, precision = #tpu.contract_precision<fp32>} : vector<8x64xf32>, vector<64x128xf32>, vector<8x128xf32> -> vector<8x128xf32>
    %cst_5 = arith.constant 5.65685415 : f32
    %9 = vector.broadcast %cst_5 : f32 to vector<8x128xf32>
    %10 = arith.mulf %8, %9 : vector<8x128xf32>
    %c0_6 = arith.constant 0 : index
    %c0_7 = arith.constant 0 : index
    %11 = vector.load %arg3[%c0_6, %c0_7] : memref<8x128xf32, #tpu.memory_space<vmem>>, vector<8x128xf32>
    tpu.vector_store %arg3[%c0_6, %c0_7], %10 {strides = array<i32>} : memref<8x128xf32, #tpu.memory_space<vmem>>, vector<8x128xf32>,
    return
  }
  func.func @transform_0(%arg0: i32) -> (i32, i32) {
    %c0_i32 = arith.constant 0 : i32
    %c0_i32_0 = arith.constant 0 : i32
    return %arg0, %c0_i32 : i32, i32
  }
  func.func @transform_1(%arg0: i32) -> (i32, i32) {
    %c0_i32 = arith.constant 0 : i32
    %c0_i32_0 = arith.constant 0 : i32
    %c0_i32_1 = arith.constant 0 : i32
    return %c0_i32, %c0_i32_0 : i32, i32
  }
  func.func @transform_2(%arg0: i32) -> (i32, i32) {
    %c0_i32 = arith.constant 0 : i32
    %c0_i32_0 = arith.constant 0 : i32
    return %arg0, %c0_i32 : i32, i32
  }
}

</mosaic_0001>

<llo_original>
// kernel: tpu_custom_call.1
$region0: #{tpu_custom_call.1}
  #allocation0 [shape = 'u32[]', space=smem, size = 0x4, offset = 0x4, fixed_abs, tag = 'smem constant byte address 0x4 - core index']
  #allocation1 [shape = 'u32[144,128]{1,0:T(1,128)}', space=vmem, size = 0x12000, scoped, tag = 'internal scratch']
  %s0 = inlined_call_operand.vmem [shape: s32[16,1], index: 0, kind: input, shape index: {}]
  %s1 = inlined_call_operand.hbm [shape: f32[64,128], index: 1, kind: input, shape index: {}]
  %s2 = inlined_call_operand.hbm [shape: f32[16,128], index: 2, kind: output, shape index: {}]
  %s3 = sld [smem:[#allocation0]]
  $region45: #{tpu_custom_call.1} parent=0
    _
  %s5 = ssub.s32 1, %s3
  %s6 = scalar_select 0, %s5, %s3
  $region1: #{tpu_custom_call.1} parent=0
    #allocation2 [shape = 'u8[32768]{0}', space=vmem, size = 0x8000, scoped, tag = 'input window, operand 1, single buffered']
    #allocation3 [shape = 's32[2]{0}', space=sflag, size = 0x8, scoped, tag = 'scoped memory for tpu_custom_call.1']
    #allocation4 [shape = 's32[2]{0}', space=sflag, size = 0x8, scoped, tag = 'scoped memory for tpu_custom_call.1']
    #allocation5 [shape = 'u8[8192]{0}', space=vmem, size = 0x2000, scoped, tag = 'output window, operand 0']
    %7 = vsyncpa [#allocation3], 0
    %8 = vsyncpa [#allocation4], 0
    %s9 = scalar_lea.sflag [#allocation4], 1
    %10 = vsyncpa %s9, 0
    loop: start=0, step=1, limit=4
    $region2: #{tpu_custom_call.1} parent=1 // loop_pre_header
      _
    $region3: #{tpu_custom_call.1} parent=1 // loop_header
      %s12 = sphi 0, %s16
      %p13 = scmp.ge.s32.totalorder %s12, 4
      %s22 = sphi 0, %s24
      %s25 = sphi 0, %s22
      %s26 = sphi 0, %s25
      %s42 = sphi 0, %s26
      %s46 = sphi 0, %s46
      %s48 = sphi 0, %s46
      %s49 = sphi 0, %s48
      %s63 = sphi 0, %s49
      %s69 = sphi 0, %s71
      %s72 = sphi 0, %s69
      %s73 = sphi 0, %s72
      %s89 = sphi 0, %s73
    $region4: #{tpu_custom_call.1} parent=1 // loop_header_branch
      %15 = sbr.rel (%p13) target = $region8
    $region5: #{tpu_custom_call.1} parent=1 // loop_body
      %s17 = ssub.s32 %s12, 1
      %s18 = ssub.s32 %s12, 2
      %s19 = sadd.s32 %s12, 1
      %s20 = ssub.s32 %s12, %s19
      %p21 = scmp.eq.s32.totalorder %s20, 0
      %s23 = sadd.s32 %s22, 1
      %s24 = scalar_select %p21, %s22, %s23
      %p27 = pneg %p21
      %p28 = scmp.eq.s32.totalorder %s12, 1
      %p29 = por %p27, %p28
      %p30 = scmp.ne.s32.totalorder %s22, %s25
      %p31 = scmp.eq.s32.totalorder %s12, 0
      %p32 = por %p30, %p31
      %p33 = scmp.ne.s32.totalorder %s22, %s25
      %p34 = scmp.eq.s32.totalorder %s17, 1
      %p35 = por %p33, %p34
      %p36 = scmp.ne.s32.totalorder %s25, %s26
      %p37 = scmp.eq.s32.totalorder %s17, 0
      %p38 = por %p36, %p37
      %p39 = scmp.ne.s32.totalorder %s25, %s26
      %p40 = scmp.eq.s32.totalorder %s18, 1
      %p41 = por %p39, %p40
      %p43 = scmp.ne.s32.totalorder %s26, %s42
      %p44 = scmp.eq.s32.totalorder %s18, 0
      %p45 = por %p43, %p44
      %s47 = sadd.s32 %s46, 1
      %p50 = scmp.eq.s32.totalorder %s12, 1
      %p51 = scmp.ne.s32.totalorder %s46, %s48
      %p52 = scmp.eq.s32.totalorder %s12, 0
      %p53 = por %p51, %p52
      %p54 = scmp.ne.s32.totalorder %s46, %s48
      %p55 = scmp.eq.s32.totalorder %s17, 1
      %p56 = por %p54, %p55
      %p57 = scmp.ne.s32.totalorder %s48, %s49
      %p58 = scmp.eq.s32.totalorder %s17, 0
      %p59 = por %p57, %p58
      %p60 = scmp.ne.s32.totalorder %s48, %s49
      %p61 = scmp.eq.s32.totalorder %s18, 1
      %p62 = por %p60, %p61
      %p64 = scmp.ne.s32.totalorder %s49, %s63
      %p65 = scmp.eq.s32.totalorder %s18, 0
      %p66 = por %p64, %p65
      %s67 = ssub.s32 %s12, %s19
      %p68 = scmp.eq.s32.totalorder %s67, 0
      %s70 = sadd.s32 %s69, 1
      %s71 = scalar_select %p68, %s69, %s70
      %p74 = pneg %p68
      %p75 = scmp.eq.s32.totalorder %s12, 1
      %p76 = por %p74, %p75
      %p77 = scmp.ne.s32.totalorder %s69, %s72
      %p78 = scmp.eq.s32.totalorder %s12, 0
      %p79 = por %p77, %p78
      %p80 = scmp.ne.s32.totalorder %s69, %s72
      %p81 = scmp.eq.s32.totalorder %s17, 1
      %p82 = por %p80, %p81
      %p83 = scmp.ne.s32.totalorder %s72, %s73
      %p84 = scmp.eq.s32.totalorder %s17, 0
      %p85 = por %p83, %p84
      %p86 = scmp.ne.s32.totalorder %s72, %s73
      %p87 = scmp.eq.s32.totalorder %s18, 1
      %p88 = por %p86, %p87
      %p90 = scmp.ne.s32.totalorder %s73, %s89
      %p91 = scmp.eq.s32.totalorder %s18, 0
      %p92 = por %p90, %p91
      %p93 = scmp.le.s32.totalorder 1, %s12
      %p94 = scmp.lt.s32.totalorder %s12, 3
      %p95 = pnand %p93, %p94
      %p96 = pneg %p95
      // Predicated region
      $region9: #{tpu_custom_call.1} parent=5 // pred_check
        _
      $region10: #{tpu_custom_call.1} parent=5 // pred_check_branch
        %98 = sbr.rel (%p95) target = $region12
      $region11: #{tpu_custom_call.1} parent=5 // pred_region
        %s99 = ssub.s32 %s12, 1
        // Predicated region
        $region13: #{tpu_custom_call.1} parent=11 // pred_check
          %p100 = pneg %p59
        $region14: #{tpu_custom_call.1} parent=11 // pred_check_branch
          %102 = sbr.rel (%p100) target = $region16
        $region15: #{tpu_custom_call.1} parent=11 // pred_region
          %s104 = ssub.s32 1024, 1024
          %105 = vsyncadd [#allocation3], %s104
          %s106 = sshll.u32 [#allocation2], 4
          %s107 = int_to_ptr.vmem [resolvable:$true] %s106
          %112 = dma.hbm_to_vmem [thread:$0]  %s1, 1024, %s107, [#allocation3], 128, 128, 8
        $region16: #{tpu_custom_call.1} parent=11 // pred_fallthru
          _
      $region12: #{tpu_custom_call.1} parent=5 // pred_fallthru
        _
      %p113 = scmp.lt.s32.totalorder %s12, 2
      // Predicated region
      $region17: #{tpu_custom_call.1} parent=5 // pred_check
        %p114 = pneg %p113
      $region18: #{tpu_custom_call.1} parent=5 // pred_check_branch
        %116 = sbr.rel (%p114) target = $region20
      $region19: #{tpu_custom_call.1} parent=5 // pred_region
        // Predicated region
        $region21: #{tpu_custom_call.1} parent=19 // pred_check
          %p117 = pneg %p32
        $region22: #{tpu_custom_call.1} parent=19 // pred_check_branch
          %119 = sbr.rel (%p117) target = $region24
        $region23: #{tpu_custom_call.1} parent=19 // pred_region
          %p120 = scmp.lt.s32.totalorder %s12, 1
          %s121 = scalar_select %p120, %s12, 1
          %s122 = smul.addr %s121, 8
          %s123 = scalar_lea.vmem %s0, %s122
        $region24: #{tpu_custom_call.1} parent=19 // pred_fallthru
          _
      $region20: #{tpu_custom_call.1} parent=5 // pred_fallthru
        _
      %p124 = scmp.le.s32.totalorder 1, %s12
      %p125 = scmp.lt.s32.totalorder %s12, 3
      %p126 = pnand %p124, %p125
      %p127 = pneg %p126
      // Predicated region
      $region25: #{tpu_custom_call.1} parent=5 // pred_check
        _
      $region26: #{tpu_custom_call.1} parent=5 // pred_check_branch
        %129 = sbr.rel (%p126) target = $region28
      $region27: #{tpu_custom_call.1} parent=5 // pred_region
        %s130 = ssub.s32 %s12, 1
        // Predicated region
        $region29: #{tpu_custom_call.1} parent=27 // pred_check
          %p131 = pneg %p59
        $region30: #{tpu_custom_call.1} parent=27 // pred_check_branch
          %133 = sbr.rel (%p131) target = $region32
        $region31: #{tpu_custom_call.1} parent=27 // pred_region
          %134 = dma.done [#allocation3], 1024
        $region32: #{tpu_custom_call.1} parent=27 // pred_fallthru
          _
        %p135 = scmp.lt.s32.totalorder %s17, 1
        %s136 = scalar_select %p135, %s17, 1
        %s137 = smul.addr %s136, 8
        %s138 = scalar_lea.vmem %s0, %s137
        %p139 = pneg %p38
        %p140 = pneg %p35
        %p141 = pneg %p59
        %p142 = pneg %p56
        %p143 = pneg %p85
        %p144 = pneg %p82
        %s145 = sand.u32 %s72, 1
        %s146 = scalar_lea.sflag [#allocation4], %s145
        %s147 = sand.u32 %s72, 1
        %s148 = smul.addr %s147, 8
        %s149 = scalar_lea.vmem [#allocation5], %s148
        %p150 = scmp.lt.s32.totalorder %s17, 1
        %s151 = scalar_select %p150, %s17, 1
        %s152 = smul.addr %s151, 8
        %s153 = scalar_lea.vmem %s0, %s152
        %v154 = vld [vmem:[%s153] sm:$0xff]
        %v155 = vlaneseq
        %v156 = vand.u32 %v155, 127
        %157 = vset.pattern.permute.xlu0 0
        %158 = vperm.xlu0 %157, %v154
        %v159 = vpop.permute.xlu0 %158
        %vm160 = vcmp.eq.s32.totalorder %v159, %v156
        %v161 = vsel %vm160, 1.0, 0.0
        %v162 = vld [vmem:[#allocation2] sm:$0xff]
        %v163 = vld [vmem:[#allocation2 + $0x8] sm:$0xff]
        %v164 = vld [vmem:[#allocation2 + $0x10] sm:$0xff]
        %v165 = vld [vmem:[#allocation2 + $0x18] sm:$0xff]
        %v166 = vld [vmem:[#allocation2 + $0x20] sm:$0xff]
        %v167 = vld [vmem:[#allocation2 + $0x28] sm:$0xff]
        %v168 = vld [vmem:[#allocation2 + $0x30] sm:$0xff]
        %v169 = vld [vmem:[#allocation2 + $0x38] sm:$0xff]
        %vm170 = vcmask 523264
        %v172 = vsel %vm170, %v161, 0
        %174 = vmatprep.subr.mxu0 0.0
        %175 = vmatpush1.msra.mxu0 0.0
        %176 = vmatprep.subr.mxu0 0.0
        %177 = vmatpush1.msra.mxu0 0.0
        %178 = vmatprep.subr.mxu0 0.0
        %179 = vmatpush1.msra.mxu0 0.0
        %180 = vmatprep.subr.mxu0 0.0
        %181 = vmatpush1.msra.mxu0 0.0
        %182 = vmatprep.subr.mxu0 0.0
        %183 = vmatpush1.msra.mxu0 0.0
        %184 = vmatprep.subr.mxu0 0.0
        %185 = vmatpush1.msra.mxu0 0.0
        %186 = vmatprep.subr.mxu0 0.0
        %187 = vmatpush1.msra.mxu0 0.0
        %188 = vmatprep.subr.mxu0 0.0
        %189 = vmatpush1.msra.mxu0 0.0
        %190 = vmatprep.subr.mxu0 0.0
        %v191 = vand.u32 %v169, 4294901760
        %192 = vmatpush1.msra.mxu0 %v191
        %193 = vmatprep.subr.mxu0 0.0
        %v194 = vand.u32 %v168, 4294901760
        %195 = vmatpush1.msra.mxu0 %v194
        %196 = vmatprep.subr.mxu0 0.0
        %v197 = vand.u32 %v167, 4294901760
        %198 = vmatpush1.msra.mxu0 %v197
        %199 = vmatprep.subr.mxu0 0.0
        %v200 = vand.u32 %v166, 4294901760
        %201 = vmatpush1.msra.mxu0 %v200
        %202 = vmatprep.subr.mxu0 0.0
        %v203 = vand.u32 %v165, 4294901760
        %204 = vmatpush1.msra.mxu0 %v203
        %205 = vmatprep.subr.mxu0 0.0
        %v206 = vand.u32 %v164, 4294901760
        %207 = vmatpush1.msra.mxu0 %v206
        %208 = vmatprep.subr.mxu0 0.0
        %v209 = vand.u32 %v163, 4294901760
        %210 = vmatpush1.msra.mxu0 %v209
        %211 = vmatprep.subr.mxu0 0.0
        %v212 = vand.u32 %v162, 4294901760
        %213 = vmatpush1.msra.mxu0 %v212
        %214 = vmatprep.subr.mxu0 0.0
        %215 = vmatpush2.msra.mxu0 0.0
        %216 = vmatprep.subr.mxu0 0.0
        %217 = vmatpush2.msra.mxu0 0.0
        %218 = vmatprep.subr.mxu0 0.0
        %219 = vmatpush2.msra.mxu0 0.0
        %220 = vmatprep.subr.mxu0 0.0
        %221 = vmatpush2.msra.mxu0 0.0
        %222 = vmatprep.subr.mxu0 0.0
        %223 = vmatpush2.msra.mxu0 0.0
        %224 = vmatprep.subr.mxu0 0.0
        %225 = vmatpush2.msra.mxu0 0.0
        %226 = vmatprep.subr.mxu0 0.0
        %227 = vmatpush2.msra.mxu0 0.0
        %228 = vmatprep.subr.mxu0 0.0
        %229 = vmatpush2.msra.mxu0 0.0
        %230 = vmatprep.subr.mxu0 0.0
        %231 = vmatpush2.msra.mxu0 0.0
        %232 = vmatprep.subr.mxu0 0.0
        %233 = vmatpush2.msra.mxu0 0.0
        %234 = vmatprep.subr.mxu0 0.0
        %235 = vmatpush2.msra.mxu0 0.0
        %236 = vmatprep.subr.mxu0 0.0
        %237 = vmatpush2.msra.mxu0 0.0
        %238 = vmatprep.subr.mxu0 0.0
        %239 = vmatpush2.msra.mxu0 0.0
        %240 = vmatprep.subr.mxu0 0.0
        %241 = vmatpush2.msra.mxu0 0.0
        %242 = vmatprep.subr.mxu0 0.0
        %243 = vmatpush2.msra.mxu0 0.0
        %244 = vmatprep.subr.mxu0 0.0
        %245 = vmatpush2.msra.mxu0 0.0
        %246 = vmatprep.mubr.f32.mxu0 0.0
        %v247 = vand.u32 %v172, 4294901760
        %v248 = vsub.f32 %v172, %v247
        %v249 = vand.u32 %v248, 4294901760
        %v250 = vsub.f32 %v248, %v249
        %v251 = vand.u32 %v250, 4294901760
        %252 = vmatmul.mubr.f32.gmra.mxu0 %v251
        %v253 = vpop.f32.mrf.mxu0
        %v254 = vadd.f32 0.0, %v253
        %v255 = vpop.f32.mrf.mxu0
        %256 = vdwg.mxu0
        %257 = vmatprep.subr.mxu0 0.0
        %258 = vmatpush1.msra.mxu0 0.0
        %259 = vmatprep.subr.mxu0 0.0
        %260 = vmatpush1.msra.mxu0 0.0
        %261 = vmatprep.subr.mxu0 0.0
        %262 = vmatpush1.msra.mxu0 0.0
        %263 = vmatprep.subr.mxu0 0.0
        %264 = vmatpush1.msra.mxu0 0.0
        %265 = vmatprep.subr.mxu0 0.0
        %266 = vmatpush1.msra.mxu0 0.0
        %267 = vmatprep.subr.mxu0 0.0
        %268 = vmatpush1.msra.mxu0 0.0
        %269 = vmatprep.subr.mxu0 0.0
        %270 = vmatpush1.msra.mxu0 0.0
        %271 = vmatprep.subr.mxu0 0.0
        %272 = vmatpush1.msra.mxu0 0.0
        %273 = vmatprep.subr.mxu0 0.0
        %v274 = vand.u32 %v169, 4294901760
        %v275 = vsub.f32 %v169, %v274
        %v276 = vand.u32 %v275, 4294901760
        %v277 = vsub.f32 %v275, %v276
        %v278 = vand.u32 %v277, 4294901760
        %279 = vmatpush1.msra.mxu0 %v278
        %280 = vmatprep.subr.mxu0 0.0
        %v281 = vand.u32 %v168, 4294901760
        %v282 = vsub.f32 %v168, %v281
        %v283 = vand.u32 %v282, 4294901760
        %v284 = vsub.f32 %v282, %v283
        %v285 = vand.u32 %v284, 4294901760
        %286 = vmatpush1.msra.mxu0 %v285
        %287 = vmatprep.subr.mxu0 0.0
        %v288 = vand.u32 %v167, 4294901760
        %v289 = vsub.f32 %v167, %v288
        %v290 = vand.u32 %v289, 4294901760
        %v291 = vsub.f32 %v289, %v290
        %v292 = vand.u32 %v291, 4294901760
        %293 = vmatpush1.msra.mxu0 %v292
        %294 = vmatprep.subr.mxu0 0.0
        %v295 = vand.u32 %v166, 4294901760
        %v296 = vsub.f32 %v166, %v295
        %v297 = vand.u32 %v296, 4294901760
        %v298 = vsub.f32 %v296, %v297
        %v299 = vand.u32 %v298, 4294901760
        %300 = vmatpush1.msra.mxu0 %v299
        %301 = vmatprep.subr.mxu0 0.0
        %v302 = vand.u32 %v165, 4294901760
        %v303 = vsub.f32 %v165, %v302
        %v304 = vand.u32 %v303, 4294901760
        %v305 = vsub.f32 %v303, %v304
        %v306 = vand.u32 %v305, 4294901760
        %307 = vmatpush1.msra.mxu0 %v306
        %308 = vmatprep.subr.mxu0 0.0
        %v309 = vand.u32 %v164, 4294901760
        %v310 = vsub.f32 %v164, %v309
        %v311 = vand.u32 %v310, 4294901760
        %v312 = vsub.f32 %v310, %v311
        %v313 = vand.u32 %v312, 4294901760
        %314 = vmatpush1.msra.mxu0 %v313
        %315 = vmatprep.subr.mxu0 0.0
        %v316 = vand.u32 %v163, 4294901760
        %v317 = vsub.f32 %v163, %v316
        %v318 = vand.u32 %v317, 4294901760
        %v319 = vsub.f32 %v317, %v318
        %v320 = vand.u32 %v319, 4294901760
        %321 = vmatpush1.msra.mxu0 %v320
        %322 = vmatprep.subr.mxu0 0.0
        %v323 = vand.u32 %v162, 4294901760
        %v324 = vsub.f32 %v162, %v323
        %v325 = vand.u32 %v324, 4294901760
        %v326 = vsub.f32 %v324, %v325
        %v327 = vand.u32 %v326, 4294901760
        %328 = vmatpush1.msra.mxu0 %v327
        %329 = vmatprep.subr.mxu0 0.0
        %330 = vmatpush2.msra.mxu0 0.0
        %331 = vmatprep.subr.mxu0 0.0
        %332 = vmatpush2.msra.mxu0 0.0
        %333 = vmatprep.subr.mxu0 0.0
        %334 = vmatpush2.msra.mxu0 0.0
        %335 = vmatprep.subr.mxu0 0.0
        %336 = vmatpush2.msra.mxu0 0.0
        %337 = vmatprep.subr.mxu0 0.0
        %338 = vmatpush2.msra.mxu0 0.0
        %339 = vmatprep.subr.mxu0 0.0
        %340 = vmatpush2.msra.mxu0 0.0
        %341 = vmatprep.subr.mxu0 0.0
        %342 = vmatpush2.msra.mxu0 0.0
        %343 = vmatprep.subr.mxu0 0.0
        %344 = vmatpush2.msra.mxu0 0.0
        %345 = vmatprep.subr.mxu0 0.0
        %346 = vmatpush2.msra.mxu0 0.0
        %347 = vmatprep.subr.mxu0 0.0
        %348 = vmatpush2.msra.mxu0 0.0
        %349 = vmatprep.subr.mxu0 0.0
        %350 = vmatpush2.msra.mxu0 0.0
        %351 = vmatprep.subr.mxu0 0.0
        %352 = vmatpush2.msra.mxu0 0.0
        %353 = vmatprep.subr.mxu0 0.0
        %354 = vmatpush2.msra.mxu0 0.0
        %355 = vmatprep.subr.mxu0 0.0
        %356 = vmatpush2.msra.mxu0 0.0
        %357 = vmatprep.subr.mxu0 0.0
        %358 = vmatpush2.msra.mxu0 0.0
        %359 = vmatprep.subr.mxu0 0.0
        %360 = vmatpush2.msra.mxu0 0.0
        %361 = vmatprep.mubr.f32.mxu0 0.0
        %v362 = vand.u32 %v172, 4294901760
        %363 = vmatmul.mubr.f32.gmra.mxu0 %v362
        %v364 = vpop.f32.mrf.mxu0
        %v365 = vadd.f32 %v254, %v364
        %v366 = vpop.f32.mrf.mxu0
        %367 = vdwg.mxu0
        %368 = vmatprep.subr.mxu0 0.0
        %369 = vmatpush1.msra.mxu0 0.0
        %370 = vmatprep.subr.mxu0 0.0
        %371 = vmatpush1.msra.mxu0 0.0
        %372 = vmatprep.subr.mxu0 0.0
        %373 = vmatpush1.msra.mxu0 0.0
        %374 = vmatprep.subr.mxu0 0.0
        %375 = vmatpush1.msra.mxu0 0.0
        %376 = vmatprep.subr.mxu0 0.0
        %377 = vmatpush1.msra.mxu0 0.0
        %378 = vmatprep.subr.mxu0 0.0
        %379 = vmatpush1.msra.mxu0 0.0
        %380 = vmatprep.subr.mxu0 0.0
        %381 = vmatpush1.msra.mxu0 0.0
        %382 = vmatprep.subr.mxu0 0.0
        %383 = vmatpush1.msra.mxu0 0.0
        %384 = vmatprep.subr.mxu0 0.0
        %v385 = vand.u32 %v169, 4294901760
        %v386 = vsub.f32 %v169, %v385
        %387 = vmatpush1.msra.mxu0 %v386
        %388 = vmatprep.subr.mxu0 0.0
        %v389 = vand.u32 %v168, 4294901760
        %v390 = vsub.f32 %v168, %v389
        %391 = vmatpush1.msra.mxu0 %v390
        %392 = vmatprep.subr.mxu0 0.0
        %v393 = vand.u32 %v167, 4294901760
        %v394 = vsub.f32 %v167, %v393
        %395 = vmatpush1.msra.mxu0 %v394
        %396 = vmatprep.subr.mxu0 0.0
        %v397 = vand.u32 %v166, 4294901760
        %v398 = vsub.f32 %v166, %v397
        %399 = vmatpush1.msra.mxu0 %v398
        %400 = vmatprep.subr.mxu0 0.0
        %v401 = vand.u32 %v165, 4294901760
        %v402 = vsub.f32 %v165, %v401
        %403 = vmatpush1.msra.mxu0 %v402
        %404 = vmatprep.subr.mxu0 0.0
        %v405 = vand.u32 %v164, 4294901760
        %v406 = vsub.f32 %v164, %v405
        %407 = vmatpush1.msra.mxu0 %v406
        %408 = vmatprep.subr.mxu0 0.0
        %v409 = vand.u32 %v163, 4294901760
        %v410 = vsub.f32 %v163, %v409
        %411 = vmatpush1.msra.mxu0 %v410
        %412 = vmatprep.subr.mxu0 0.0
        %v413 = vand.u32 %v162, 4294901760
        %v414 = vsub.f32 %v162, %v413
        %415 = vmatpush1.msra.mxu0 %v414
        %416 = vmatprep.subr.mxu0 0.0
        %417 = vmatpush2.msra.mxu0 0.0
        %418 = vmatprep.subr.mxu0 0.0
        %419 = vmatpush2.msra.mxu0 0.0
        %420 = vmatprep.subr.mxu0 0.0
        %421 = vmatpush2.msra.mxu0 0.0
        %422 = vmatprep.subr.mxu0 0.0
        %423 = vmatpush2.msra.mxu0 0.0
        %424 = vmatprep.subr.mxu0 0.0
        %425 = vmatpush2.msra.mxu0 0.0
        %426 = vmatprep.subr.mxu0 0.0
        %427 = vmatpush2.msra.mxu0 0.0
        %428 = vmatprep.subr.mxu0 0.0
        %429 = vmatpush2.msra.mxu0 0.0
        %430 = vmatprep.subr.mxu0 0.0
        %431 = vmatpush2.msra.mxu0 0.0
        %432 = vmatprep.subr.mxu0 0.0
        %433 = vmatpush2.msra.mxu0 0.0
        %434 = vmatprep.subr.mxu0 0.0
        %435 = vmatpush2.msra.mxu0 0.0
        %436 = vmatprep.subr.mxu0 0.0
        %437 = vmatpush2.msra.mxu0 0.0
        %438 = vmatprep.subr.mxu0 0.0
        %439 = vmatpush2.msra.mxu0 0.0
        %440 = vmatprep.subr.mxu0 0.0
        %441 = vmatpush2.msra.mxu0 0.0
        %442 = vmatprep.subr.mxu0 0.0
        %443 = vmatpush2.msra.mxu0 0.0
        %444 = vmatprep.subr.mxu0 0.0
        %445 = vmatpush2.msra.mxu0 0.0
        %446 = vmatprep.subr.mxu0 0.0
        %447 = vmatpush2.msra.mxu0 0.0
        %448 = vmatprep.mubr.f32.mxu0 0.0
        %v449 = vand.u32 %v172, 4294901760
        %v450 = vsub.f32 %v172, %v449
        %451 = vmatmul.mubr.f32.gmra.mxu0 %v450
        %v452 = vpop.f32.mrf.mxu0
        %v453 = vadd.f32 %v365, %v452
        %v454 = vpop.f32.mrf.mxu0
        %455 = vdwg.mxu0
        %456 = vmatprep.subr.mxu0 0.0
        %457 = vmatpush1.msra.mxu0 0.0
        %458 = vmatprep.subr.mxu0 0.0
        %459 = vmatpush1.msra.mxu0 0.0
        %460 = vmatprep.subr.mxu0 0.0
        %461 = vmatpush1.msra.mxu0 0.0
        %462 = vmatprep.subr.mxu0 0.0
        %463 = vmatpush1.msra.mxu0 0.0
        %464 = vmatprep.subr.mxu0 0.0
        %465 = vmatpush1.msra.mxu0 0.0
        %466 = vmatprep.subr.mxu0 0.0
        %467 = vmatpush1.msra.mxu0 0.0
        %468 = vmatprep.subr.mxu0 0.0
        %469 = vmatpush1.msra.mxu0 0.0
        %470 = vmatprep.subr.mxu0 0.0
        %471 = vmatpush1.msra.mxu0 0.0
        %472 = vmatprep.subr.mxu0 0.0
        %v473 = vand.u32 %v169, 4294901760
        %474 = vmatpush1.msra.mxu0 %v473
        %475 = vmatprep.subr.mxu0 0.0
        %v476 = vand.u32 %v168, 4294901760
        %477 = vmatpush1.msra.mxu0 %v476
        %478 = vmatprep.subr.mxu0 0.0
        %v479 = vand.u32 %v167, 4294901760
        %480 = vmatpush1.msra.mxu0 %v479
        %481 = vmatprep.subr.mxu0 0.0
        %v482 = vand.u32 %v166, 4294901760
        %483 = vmatpush1.msra.mxu0 %v482
        %484 = vmatprep.subr.mxu0 0.0
        %v485 = vand.u32 %v165, 4294901760
        %486 = vmatpush1.msra.mxu0 %v485
        %487 = vmatprep.subr.mxu0 0.0
        %v488 = vand.u32 %v164, 4294901760
        %489 = vmatpush1.msra.mxu0 %v488
        %490 = vmatprep.subr.mxu0 0.0
        %v491 = vand.u32 %v163, 4294901760
        %492 = vmatpush1.msra.mxu0 %v491
        %493 = vmatprep.subr.mxu0 0.0
        %v494 = vand.u32 %v162, 4294901760
        %495 = vmatpush1.msra.mxu0 %v494
        %496 = vmatprep.subr.mxu0 0.0
        %497 = vmatpush2.msra.mxu0 0.0
        %498 = vmatprep.subr.mxu0 0.0
        %499 = vmatpush2.msra.mxu0 0.0
        %500 = vmatprep.subr.mxu0 0.0
        %501 = vmatpush2.msra.mxu0 0.0
        %502 = vmatprep.subr.mxu0 0.0
        %503 = vmatpush2.msra.mxu0 0.0
        %504 = vmatprep.subr.mxu0 0.0
        %505 = vmatpush2.msra.mxu0 0.0
        %506 = vmatprep.subr.mxu0 0.0
        %507 = vmatpush2.msra.mxu0 0.0
        %508 = vmatprep.subr.mxu0 0.0
        %509 = vmatpush2.msra.mxu0 0.0
        %510 = vmatprep.subr.mxu0 0.0
        %511 = vmatpush2.msra.mxu0 0.0
        %512 = vmatprep.subr.mxu0 0.0
        %513 = vmatpush2.msra.mxu0 0.0
        %514 = vmatprep.subr.mxu0 0.0
        %515 = vmatpush2.msra.mxu0 0.0
        %516 = vmatprep.subr.mxu0 0.0
        %517 = vmatpush2.msra.mxu0 0.0
        %518 = vmatprep.subr.mxu0 0.0
        %519 = vmatpush2.msra.mxu0 0.0
        %520 = vmatprep.subr.mxu0 0.0
        %521 = vmatpush2.msra.mxu0 0.0
        %522 = vmatprep.subr.mxu0 0.0
        %523 = vmatpush2.msra.mxu0 0.0
        %524 = vmatprep.subr.mxu0 0.0
        %525 = vmatpush2.msra.mxu0 0.0
        %526 = vmatprep.subr.mxu0 0.0
        %527 = vmatpush2.msra.mxu0 0.0
        %528 = vmatprep.mubr.f32.mxu0 0.0
        %v529 = vand.u32 %v172, 4294901760
        %v530 = vsub.f32 %v172, %v529
        %v531 = vand.u32 %v530, 4294901760
        %532 = vmatmul.mubr.f32.gmra.mxu0 %v531
        %v533 = vpop.f32.mrf.mxu0
        %v534 = vadd.f32 %v453, %v533
        %v535 = vpop.f32.mrf.mxu0
        %536 = vdwg.mxu0
        %537 = vmatprep.subr.mxu0 0.0
        %538 = vmatpush1.msra.mxu0 0.0
        %539 = vmatprep.subr.mxu0 0.0
        %540 = vmatpush1.msra.mxu0 0.0
        %541 = vmatprep.subr.mxu0 0.0
        %542 = vmatpush1.msra.mxu0 0.0
        %543 = vmatprep.subr.mxu0 0.0
        %544 = vmatpush1.msra.mxu0 0.0
        %545 = vmatprep.subr.mxu0 0.0
        %546 = vmatpush1.msra.mxu0 0.0
        %547 = vmatprep.subr.mxu0 0.0
        %548 = vmatpush1.msra.mxu0 0.0
        %549 = vmatprep.subr.mxu0 0.0
        %550 = vmatpush1.msra.mxu0 0.0
        %551 = vmatprep.subr.mxu0 0.0
        %552 = vmatpush1.msra.mxu0 0.0
        %553 = vmatprep.subr.mxu0 0.0
        %v554 = vand.u32 %v169, 4294901760
        %v555 = vsub.f32 %v169, %v554
        %v556 = vand.u32 %v555, 4294901760
        %557 = vmatpush1.msra.mxu0 %v556
        %558 = vmatprep.subr.mxu0 0.0
        %v559 = vand.u32 %v168, 4294901760
        %v560 = vsub.f32 %v168, %v559
        %v561 = vand.u32 %v560, 4294901760
        %562 = vmatpush1.msra.mxu0 %v561
        %563 = vmatprep.subr.mxu0 0.0
        %v564 = vand.u32 %v167, 4294901760
        %v565 = vsub.f32 %v167, %v564
        %v566 = vand.u32 %v565, 4294901760
        %567 = vmatpush1.msra.mxu0 %v566
        %568 = vmatprep.subr.mxu0 0.0
        %v569 = vand.u32 %v166, 4294901760
        %v570 = vsub.f32 %v166, %v569
        %v571 = vand.u32 %v570, 4294901760
        %572 = vmatpush1.msra.mxu0 %v571
        %573 = vmatprep.subr.mxu0 0.0
        %v574 = vand.u32 %v165, 4294901760
        %v575 = vsub.f32 %v165, %v574
        %v576 = vand.u32 %v575, 4294901760
        %577 = vmatpush1.msra.mxu0 %v576
        %578 = vmatprep.subr.mxu0 0.0
        %v579 = vand.u32 %v164, 4294901760
        %v580 = vsub.f32 %v164, %v579
        %v581 = vand.u32 %v580, 4294901760
        %582 = vmatpush1.msra.mxu0 %v581
        %583 = vmatprep.subr.mxu0 0.0
        %v584 = vand.u32 %v163, 4294901760
        %v585 = vsub.f32 %v163, %v584
        %v586 = vand.u32 %v585, 4294901760
        %587 = vmatpush1.msra.mxu0 %v586
        %588 = vmatprep.subr.mxu0 0.0
        %v589 = vand.u32 %v162, 4294901760
        %v590 = vsub.f32 %v162, %v589
        %v591 = vand.u32 %v590, 4294901760
        %592 = vmatpush1.msra.mxu0 %v591
        %593 = vmatprep.subr.mxu0 0.0
        %594 = vmatpush2.msra.mxu0 0.0
        %595 = vmatprep.subr.mxu0 0.0
        %596 = vmatpush2.msra.mxu0 0.0
        %597 = vmatprep.subr.mxu0 0.0
        %598 = vmatpush2.msra.mxu0 0.0
        %599 = vmatprep.subr.mxu0 0.0
        %600 = vmatpush2.msra.mxu0 0.0
        %601 = vmatprep.subr.mxu0 0.0
        %602 = vmatpush2.msra.mxu0 0.0
        %603 = vmatprep.subr.mxu0 0.0
        %604 = vmatpush2.msra.mxu0 0.0
        %605 = vmatprep.subr.mxu0 0.0
        %606 = vmatpush2.msra.mxu0 0.0
        %607 = vmatprep.subr.mxu0 0.0
        %608 = vmatpush2.msra.mxu0 0.0
        %609 = vmatprep.subr.mxu0 0.0
        %610 = vmatpush2.msra.mxu0 0.0
        %611 = vmatprep.subr.mxu0 0.0
        %612 = vmatpush2.msra.mxu0 0.0
        %613 = vmatprep.subr.mxu0 0.0
        %614 = vmatpush2.msra.mxu0 0.0
        %615 = vmatprep.subr.mxu0 0.0
        %616 = vmatpush2.msra.mxu0 0.0
        %617 = vmatprep.subr.mxu0 0.0
        %618 = vmatpush2.msra.mxu0 0.0
        %619 = vmatprep.subr.mxu0 0.0
        %620 = vmatpush2.msra.mxu0 0.0
        %621 = vmatprep.subr.mxu0 0.0
        %622 = vmatpush2.msra.mxu0 0.0
        %623 = vmatprep.subr.mxu0 0.0
        %624 = vmatpush2.msra.mxu0 0.0
        %625 = vmatprep.mubr.f32.mxu0 0.0
        %v626 = vand.u32 %v172, 4294901760
        %627 = vmatmul.mubr.f32.gmra.mxu0 %v626
        %v628 = vpop.f32.mrf.mxu0
        %v629 = vadd.f32 %v534, %v628
        %v630 = vpop.f32.mrf.mxu0
        %631 = vdwg.mxu0
        %632 = vmatprep.subr.mxu0 0.0
        %633 = vmatpush1.msra.mxu0 0.0
        %634 = vmatprep.subr.mxu0 0.0
        %635 = vmatpush1.msra.mxu0 0.0
        %636 = vmatprep.subr.mxu0 0.0
        %637 = vmatpush1.msra.mxu0 0.0
        %638 = vmatprep.subr.mxu0 0.0
        %639 = vmatpush1.msra.mxu0 0.0
        %640 = vmatprep.subr.mxu0 0.0
        %641 = vmatpush1.msra.mxu0 0.0
        %642 = vmatprep.subr.mxu0 0.0
        %643 = vmatpush1.msra.mxu0 0.0
        %644 = vmatprep.subr.mxu0 0.0
        %645 = vmatpush1.msra.mxu0 0.0
        %646 = vmatprep.subr.mxu0 0.0
        %647 = vmatpush1.msra.mxu0 0.0
        %648 = vmatprep.subr.mxu0 0.0
        %v649 = vand.u32 %v169, 4294901760
        %650 = vmatpush1.msra.mxu0 %v649
        %651 = vmatprep.subr.mxu0 0.0
        %v652 = vand.u32 %v168, 4294901760
        %653 = vmatpush1.msra.mxu0 %v652
        %654 = vmatprep.subr.mxu0 0.0
        %v655 = vand.u32 %v167, 4294901760
        %656 = vmatpush1.msra.mxu0 %v655
        %657 = vmatprep.subr.mxu0 0.0
        %v658 = vand.u32 %v166, 4294901760
        %659 = vmatpush1.msra.mxu0 %v658
        %660 = vmatprep.subr.mxu0 0.0
        %v661 = vand.u32 %v165, 4294901760
        %662 = vmatpush1.msra.mxu0 %v661
        %663 = vmatprep.subr.mxu0 0.0
        %v664 = vand.u32 %v164, 4294901760
        %665 = vmatpush1.msra.mxu0 %v664
        %666 = vmatprep.subr.mxu0 0.0
        %v667 = vand.u32 %v163, 4294901760
        %668 = vmatpush1.msra.mxu0 %v667
        %669 = vmatprep.subr.mxu0 0.0
        %v670 = vand.u32 %v162, 4294901760
        %671 = vmatpush1.msra.mxu0 %v670
        %672 = vmatprep.subr.mxu0 0.0
        %673 = vmatpush2.msra.mxu0 0.0
        %674 = vmatprep.subr.mxu0 0.0
        %675 = vmatpush2.msra.mxu0 0.0
        %676 = vmatprep.subr.mxu0 0.0
        %677 = vmatpush2.msra.mxu0 0.0
        %678 = vmatprep.subr.mxu0 0.0
        %679 = vmatpush2.msra.mxu0 0.0
        %680 = vmatprep.subr.mxu0 0.0
        %681 = vmatpush2.msra.mxu0 0.0
        %682 = vmatprep.subr.mxu0 0.0
        %683 = vmatpush2.msra.mxu0 0.0
        %684 = vmatprep.subr.mxu0 0.0
        %685 = vmatpush2.msra.mxu0 0.0
        %686 = vmatprep.subr.mxu0 0.0
        %687 = vmatpush2.msra.mxu0 0.0
        %688 = vmatprep.subr.mxu0 0.0
        %689 = vmatpush2.msra.mxu0 0.0
        %690 = vmatprep.subr.mxu0 0.0
        %691 = vmatpush2.msra.mxu0 0.0
        %692 = vmatprep.subr.mxu0 0.0
        %693 = vmatpush2.msra.mxu0 0.0
        %694 = vmatprep.subr.mxu0 0.0
        %695 = vmatpush2.msra.mxu0 0.0
        %696 = vmatprep.subr.mxu0 0.0
        %697 = vmatpush2.msra.mxu0 0.0
        %698 = vmatprep.subr.mxu0 0.0
        %699 = vmatpush2.msra.mxu0 0.0
        %700 = vmatprep.subr.mxu0 0.0
        %701 = vmatpush2.msra.mxu0 0.0
        %702 = vmatprep.subr.mxu0 0.0
        %703 = vmatpush2.msra.mxu0 0.0
        %704 = vmatprep.mubr.f32.mxu0 0.0
        %v705 = vand.u32 %v172, 4294901760
        %706 = vmatmul.mubr.f32.gmra.mxu0 %v705
        %v707 = vpop.f32.mrf.mxu0
        %v708 = vadd.f32 %v629, %v707
        %v709 = vpop.f32.mrf.mxu0
        %710 = vdwg.mxu0
        %v711 = vmul.f32 %v708, 5.656854
        %712 = vst [vmem:[%s149] sm:$0xff] %v711
        %s713 = sand.u32 %s72, 1
        %s714 = scalar_lea.sflag [#allocation4], %s713
        %s715 = sand.u32 %s72, 1
        %s716 = smul.addr %s715, 8
        %s717 = scalar_lea.vmem [#allocation5], %s716
        // Predicated region
        $region33: #{tpu_custom_call.1} parent=27 // pred_check
          %p718 = pneg %p82
        $region34: #{tpu_custom_call.1} parent=27 // pred_check_branch
          %720 = sbr.rel (%p718) target = $region36
        $region35: #{tpu_custom_call.1} parent=27 // pred_region
          %s722 = ssub.s32 128, 128
          %723 = vsyncadd %s714, %s722
          %s724 = smul.addr %s17, 128
          %s725 = scalar_lea.hbm %s2, %s724
          %s727 = sshll.u32 %s717, 4
          %s728 = int_to_ptr.vmem [resolvable:$true] %s727
          %730 = dma.vmem_to_hbm [thread:$0]  %s728, 128, %s725, %s714
        $region36: #{tpu_custom_call.1} parent=27 // pred_fallthru
          _
      $region28: #{tpu_custom_call.1} parent=5 // pred_fallthru
        _
      %p731 = scmp.le.s32.totalorder 2, %s12
      // Predicated region
      $region37: #{tpu_custom_call.1} parent=5 // pred_check
        %p732 = pneg %p731
      $region38: #{tpu_custom_call.1} parent=5 // pred_check_branch
        %734 = sbr.rel (%p732) target = $region40
      $region39: #{tpu_custom_call.1} parent=5 // pred_region
        %s735 = ssub.s32 %s12, 2
        // Predicated region
        $region41: #{tpu_custom_call.1} parent=39 // pred_check
          %p736 = pneg %p88
        $region42: #{tpu_custom_call.1} parent=39 // pred_check_branch
          %738 = sbr.rel (%p736) target = $region44
        $region43: #{tpu_custom_call.1} parent=39 // pred_region
          %s739 = sand.u32 %s73, 1
          %s740 = scalar_lea.sflag [#allocation4], %s739
          %s741 = sand.u32 %s73, 1
          %s742 = smul.addr %s741, 8
          %s743 = scalar_lea.vmem [#allocation5], %s742
          %744 = dma.done %s740, 128
        $region44: #{tpu_custom_call.1} parent=39 // pred_fallthru
          _
      $region40: #{tpu_custom_call.1} parent=5 // pred_fallthru
        _
    $region6: #{tpu_custom_call.1} parent=1 // loop_footer
      %s16 = sadd.s32 1, %s12
    $region7: #{tpu_custom_call.1} parent=1 // loop_footer_branch
      %11 = sbr.rel target = $region3
    $region8: #{tpu_custom_call.1} parent=1 // loop_exit
      _
    %745 = vsyncpa [#allocation3], 1
    %s746 = scalar_lea.sflag [#allocation3], 1
    %747 = vsyncpa %s746, 1
    %748 = vsyncpa [#allocation4], 1
    %s749 = scalar_lea.sflag [#allocation4], 1
    %750 = vsyncpa %s749, 1

</llo_original>
